<compile_context>
chip_gen: v7x
topology: tpu7x:2x2x1
jax: 0.10.0
libtpu: 0.0.40
codegen_flags: <defaults>
</compile_context>

<pallas_src>
import functools

import jax
import jax.numpy as jnp
from jax.experimental import pallas as pl
from jax.experimental.pallas import tpu as pltpu


def _round_up(a, b):
    return (a + b - 1) // b * b


def club_sample_kernel(x_ref, y_ref, y_shuf_ref,
                       w1_ref, b1_ref, w2_ref, b2_ref,
                       out_ref, *, hid, y_dim, batch, tile_b, fused_l2):
    # ---- fused first layer: hidden = ReLU(x @ [W1_mu | W1_lv] + [b1_mu | b1_lv])
    x_bf = x_ref[...].astype(jnp.bfloat16)          # no-op when caller streams bf16
    hidden = jnp.dot(x_bf, w1_ref[...], preferred_element_type=jnp.float32)
    hidden = jnp.maximum(hidden + b1_ref[...], 0.0)
    h_bf = hidden.astype(jnp.bfloat16)

    # ---- second layer: [mu | pre_logvar]
    if fused_l2:
        # Small heads: a single MXU push on the block-diagonal [2h, 2*y_dim] weight.
        out2 = jnp.dot(h_bf, w2_ref[...], preferred_element_type=jnp.float32) + b2_ref[...]
        mu, pre_lv = out2[:, :y_dim], out2[:, y_dim:]
    else:
        # MXU-tile-sized heads: two real h x y_dim products (no zero-block MACs;
        # mu / pre_logvar are separate full tiles -> no output lane slicing).
        mu = jnp.dot(h_bf[:, :hid], w2_ref[0], preferred_element_type=jnp.float32) + b2_ref[0]
        pre_lv = jnp.dot(h_bf[:, hid:], w2_ref[1], preferred_element_type=jnp.float32) + b2_ref[1]

    logvar = jnp.tanh(pre_lv)
    # TODO(synk): on v6e/v7x run tanh/exp in bf16 (2x EUP rate); keep f32 on v5e.

    # positive - negative == ((mu - y_shuf)^2 - (mu - y)^2) * exp(-logvar)
    contrib = ((mu - y_shuf_ref[...]) ** 2 - (mu - y_ref[...]) ** 2) * jnp.exp(-logvar)

    # Ragged last tile: rows past the true batch are undefined reads -> select to 0
    # (jnp.where select, so garbage / NaN padding never propagates).
    if batch % tile_b != 0:
        row = (jax.lax.broadcasted_iota(jnp.int32, (tile_b, 1), 0)
               + pl.program_id(0) * tile_b)
        contrib = jnp.where(row < batch, contrib, 0.0)

    # VALU-only sublane-group fold to an (8, y_dim) per-tile partial sum; the
    # single cross-lane/sublane reduction over all partials runs in the wrapper.
    out_ref[...] = contrib.reshape(tile_b // 8, 8, y_dim).sum(axis=0)


def club_sample_forward(x, y, params, perm, *, tile_b=1024,
                        vmem_limit_bytes=48 * 1024 * 1024):
    """CLUBSample.forward.

    `params` holds four f32 Linear layers with [in, out] weights. x / y may be
    f32 or bf16 (bf16 halves HBM traffic; matmuls run in bf16 either way, with
    f32 accumulation and an f32 epilogue).

    tile_b / vmem_limit_bytes guidance: v6e 1024-2048 rows (limit 64-96 MiB),
    v5e 512-1024 rows (set the limit explicitly; default scoped VMEM is 16 MiB),
    v7x keep the double-buffered tiles + weights under ~48 MiB (64 MiB physical).
    """
    B, x_dim = x.shape
    y_dim = y.shape[-1]
    hid = params["w1m"].shape[1]

    # ---- one-time parameter fusion (tiny arrays) ---------------------------
    w1 = jnp.concatenate([params["w1m"], params["w1l"]], axis=1).astype(jnp.bfloat16)
    b1 = jnp.concatenate([params["b1m"], params["b1l"]], axis=1)              # [1, 2h] f32
    fused_l2 = (hid < 128) and (y_dim < 128)       # both heads fit one MXU tile
    if fused_l2:
        w2 = jnp.zeros((2 * hid, 2 * y_dim), jnp.float32)
        w2 = w2.at[:hid, :y_dim].set(params["w2m"]).at[hid:, y_dim:].set(params["w2l"])
        b2 = jnp.concatenate([params["b2m"], params["b2l"]], axis=1)          # [1, 2*y_dim]
    else:
        w2 = jnp.stack([params["w2m"], params["w2l"]], axis=0)                # [2, h, y_dim]
        b2 = jnp.stack([params["b2m"], params["b2l"]], axis=0)                # [2, 1, y_dim]
    w2 = w2.astype(jnp.bfloat16)   # bf16 MXU operands, f32 accumulation in-kernel

    # TODO(synk): when B*y_dim fits in ~16-24 MiB, keep y resident in VMEM, pass
    # perm via PrefetchScalarGridSpec and gather y_shuf rows in-kernel to remove
    # this gather's extra HBM write + re-read of y.
    y_shuf = y[perm]

    # ---- batch tiling: ragged last tile handled in-kernel (no jnp.pad copies)
    tb = _round_up(min(int(tile_b), _round_up(B, 8)), 8)
    num_tiles = pl.cdiv(B, tb)

    kernel = functools.partial(club_sample_kernel, hid=hid, y_dim=y_dim,
                               batch=B, tile_b=tb, fused_l2=fused_l2)

    row = lambda i: (i, 0)
    const2 = lambda i: (0, 0)
    # TODO(synk): single-buffer the constant weight blocks with
    # pipeline_mode=pl.Buffered(1) to reclaim their double-buffer VMEM at large
    # x_dim/hid (matters most on v7x's 64 MiB VMEM).
    in_specs = [
        pl.BlockSpec((tb, x_dim), row),
        pl.BlockSpec((tb, y_dim), row),
        pl.BlockSpec((tb, y_dim), row),
        pl.BlockSpec(w1.shape, const2),                  # resident, constant block
        pl.BlockSpec(b1.shape, const2),
        pl.BlockSpec(w2.shape, lambda i: (0,) * w2.ndim),
        pl.BlockSpec(b2.shape, lambda i: (0,) * b2.ndim),
    ]

    partials = pl.pallas_call(
        kernel,
        out_shape=jax.ShapeDtypeStruct((num_tiles * 8, y_dim), jnp.float32),
        grid=(num_tiles,),
        in_specs=in_specs,
        out_specs=pl.BlockSpec((8, y_dim), row),
        compiler_params=pltpu.CompilerParams(
            # Each step writes only its own partial block -> fully parallel grid
            # (no cross-step accumulator), so v7x megacore can split the batch.
            dimension_semantics=("parallel",),
            vmem_limit_bytes=vmem_limit_bytes,
        ),
    )(x, y, y_shuf, w1, b1, w2, b2)

    # Tiny wrapper-side reduction of the per-tile partials, scaled by the true B.
    return jnp.sum(partials) / (2.0 * B)


def init_params(key, x_dim, y_dim, hidden_size):
    h = hidden_size // 2

    def linear(key, fan_in, fan_out):
        kw, kb = jax.random.split(key)
        bound = 1.0 / (fan_in ** 0.5)
        w = jax.random.uniform(kw, (fan_in, fan_out), jnp.float32, -bound, bound)
        b = jax.random.uniform(kb, (1, fan_out), jnp.float32, -bound, bound)
        return w, b

    k1, k2, k3, k4 = jax.random.split(key, 4)
    w1m, b1m = linear(k1, x_dim, h)
    w2m, b2m = linear(k2, h, y_dim)
    w1l, b1l = linear(k3, x_dim, h)
    w2l, b2l = linear(k4, h, y_dim)
    return dict(w1m=w1m, b1m=b1m, w2m=w2m, b2m=b2m,
                w1l=w1l, b1l=b1l, w2l=w2l, b2l=b2l)


def reference_forward(x, y, params, perm):
    """Pure-JAX reference of the PyTorch forward, mirroring the kernel's mixed
    precision (bf16 matmul operands, f32 accumulation / f32 epilogue)."""
    bf, f32 = jnp.bfloat16, jnp.float32
    xb = x.astype(bf)
    h_mu = jnp.maximum(
        jnp.dot(xb, params["w1m"].astype(bf), preferred_element_type=f32) + params["b1m"], 0.0)
    mu = jnp.dot(h_mu.astype(bf), params["w2m"].astype(bf),
                 preferred_element_type=f32) + params["b2m"]
    h_lv = jnp.maximum(
        jnp.dot(xb, params["w1l"].astype(bf), preferred_element_type=f32) + params["b1l"], 0.0)
    logvar = jnp.tanh(
        jnp.dot(h_lv.astype(bf), params["w2l"].astype(bf),
                preferred_element_type=f32) + params["b2l"])
    pos = -(mu - y) ** 2 / jnp.exp(logvar)
    neg = -(mu - y[perm]) ** 2 / jnp.exp(logvar)
    return jnp.mean(pos.sum(-1) - neg.sum(-1)) / 2.0


if __name__ == "__main__":
    key = jax.random.PRNGKey(0)

    configs = [
        # Small dims -> fused block-diagonal layer-2 path; ragged last tile (20 % 8 = 4).
        dict(B=20, x_dim=16, y_dim=16, hidden_size=32, tile_b=8, dtype=jnp.float32),
        # MXU-tile-sized heads -> split layer-2 path; bf16 streamed inputs; ragged tile.
        dict(B=300, x_dim=64, y_dim=128, hidden_size=256, tile_b=128, dtype=jnp.bfloat16),
    ]
    for cfg in configs:
        key, kp, kx, ky, kperm = jax.random.split(key, 5)
        params = init_params(kp, cfg["x_dim"], cfg["y_dim"], cfg["hidden_size"])
        x = jax.random.normal(kx, (cfg["B"], cfg["x_dim"]), jnp.float32).astype(cfg["dtype"])
        y = jax.random.normal(ky, (cfg["B"], cfg["y_dim"]), jnp.float32).astype(cfg["dtype"])
        perm = jax.random.permutation(kperm, cfg["B"])      # stands in for torch.randperm

        out = jax.block_until_ready(
            club_sample_forward(x, y, params, perm, tile_b=cfg["tile_b"]))
        ref = reference_forward(x, y, params, perm)
        assert jnp.allclose(out, ref, rtol=2e-2, atol=2e-2), (cfg, out, ref)

    print("KERNEL_OK")
</pallas_src>

<mosaic_0001>
module attributes {stable_mosaic.version = 11 : i64} {
  func.func @club_sample_kernel(%arg0: i32, %arg1: memref<8x16xf32, #tpu.memory_space<vmem>>, %arg2: memref<8x16xf32, #tpu.memory_space<vmem>>, %arg3: memref<8x16xf32, #tpu.memory_space<vmem>>, %arg4: memref<16x32xbf16, #tpu.memory_space<vmem>>, %arg5: memref<1x32xf32, #tpu.memory_space<vmem>>, %arg6: memref<32x32xbf16, #tpu.memory_space<vmem>>, %arg7: memref<1x32xf32, #tpu.memory_space<vmem>>, %arg8: memref<8x16xf32, #tpu.memory_space<vmem>>) attributes {dimension_semantics = [#tpu.dimension_semantics<parallel>], iteration_bounds = array<i64: 3>, scalar_prefetch = 0 : i64, scratch_operands = 0 : i64, tpu.core_type = #tpu.core_type<tc>, window_params = [{transform_indices = @transform_0, window_bounds = array<i64: 8, 16>}, {transform_indices = @transform_1, window_bounds = array<i64: 8, 16>}, {transform_indices = @transform_2, window_bounds = array<i64: 8, 16>}, {pipeline_mode = #tpu.pipeline_mode<synchronous>, transform_indices = @transform_3, window_bounds = array<i64: 16, 32>}, {pipeline_mode = #tpu.pipeline_mode<synchronous>, transform_indices = @transform_4, window_bounds = array<i64: 1, 32>}, {pipeline_mode = #tpu.pipeline_mode<synchronous>, transform_indices = @transform_5, window_bounds = array<i64: 32, 32>}, {pipeline_mode = #tpu.pipeline_mode<synchronous>, transform_indices = @transform_6, window_bounds = array<i64: 1, 32>}, {transform_indices = @transform_7, window_bounds = array<i64: 8, 16>}]} {
    %c0 = arith.constant 0 : index
    %c0_0 = arith.constant 0 : index
    %0 = vector.load %arg1[%c0, %c0_0] : memref<8x16xf32, #tpu.memory_space<vmem>>, vector<8x16xf32>
    %1 = arith.truncf %0 : vector<8x16xf32> to vector<8x16xbf16>
    %c0_1 = arith.constant 0 : index
    %c0_2 = arith.constant 0 : index
    %2 = vector.load %arg4[%c0_1, %c0_2] : memref<16x32xbf16, #tpu.memory_space<vmem>>, vector<16x32xbf16>
    %cst = arith.constant dense<0.000000e+00> : vector<8x32xf32>
    %3 = tpu.matmul %1, %2, %cst {dimension_numbers = #tpu.dot_dimension_numbers<[1], [0], [0], [1], [0, 0, 1, 1], [], []>} : vector<8x16xbf16>, vector<16x32xbf16>, vector<8x32xf32> -> vector<8x32xf32>
    %c0_3 = arith.constant 0 : index
    %c0_4 = arith.constant 0 : index
    %4 = vector.load %arg5[%c0_3, %c0_4] : memref<1x32xf32, #tpu.memory_space<vmem>>, vector<1x32xf32>
    %5 = vector.broadcast %4 : vector<1x32xf32> to vector<8x32xf32>
    %6 = arith.addf %3, %5 : vector<8x32xf32>
    %cst_5 = arith.constant 0.000000e+00 : f32
    %7 = vector.broadcast %cst_5 : f32 to vector<8x32xf32>
    %8 = arith.maximumf %6, %7 : vector<8x32xf32>
    %9 = arith.truncf %8 : vector<8x32xf32> to vector<8x32xbf16>
    %c0_6 = arith.constant 0 : index
    %c0_7 = arith.constant 0 : index
    %10 = vector.load %arg6[%c0_6, %c0_7] : memref<32x32xbf16, #tpu.memory_space<vmem>>, vector<32x32xbf16>
    %cst_8 = arith.constant dense<0.000000e+00> : vector<8x32xf32>
    %11 = tpu.matmul %9, %10, %cst_8 {dimension_numbers = #tpu.dot_dimension_numbers<[1], [0], [0], [1], [0, 0, 1, 1], [], []>} : vector<8x32xbf16>, vector<32x32xbf16>, vector<8x32xf32> -> vector<8x32xf32>
    %c0_9 = arith.constant 0 : index
    %c0_10 = arith.constant 0 : index
    %12 = vector.load %arg7[%c0_9, %c0_10] : memref<1x32xf32, #tpu.memory_space<vmem>>, vector<1x32xf32>
    %13 = vector.broadcast %12 : vector<1x32xf32> to vector<8x32xf32>
    %14 = arith.addf %11, %13 : vector<8x32xf32>
    %15 = vector.extract_strided_slice %14 {offsets = [0, 0], sizes = [8, 16], strides = [1, 1]} : vector<8x32xf32> to vector<8x16xf32>
    %16 = vector.extract_strided_slice %14 {offsets = [0, 16], sizes = [8, 16], strides = [1, 1]} : vector<8x32xf32> to vector<8x16xf32>
    %17 = math.tanh %16 : vector<8x16xf32>
    %c0_11 = arith.constant 0 : index
    %c0_12 = arith.constant 0 : index
    %18 = vector.load %arg3[%c0_11, %c0_12] : memref<8x16xf32, #tpu.memory_space<vmem>>, vector<8x16xf32>
    %19 = arith.subf %15, %18 : vector<8x16xf32>
    %20 = arith.mulf %19, %19 : vector<8x16xf32>
    %c0_13 = arith.constant 0 : index
    %c0_14 = arith.constant 0 : index
    %21 = vector.load %arg2[%c0_13, %c0_14] : memref<8x16xf32, #tpu.memory_space<vmem>>, vector<8x16xf32>
    %22 = arith.subf %15, %21 : vector<8x16xf32>
    %23 = arith.mulf %22, %22 : vector<8x16xf32>
    %24 = arith.subf %20, %23 : vector<8x16xf32>
    %cst_15 = arith.constant 0.000000e+00 : f32
    %25 = vector.broadcast %cst_15 : f32 to vector<8x16xf32>
    %26 = arith.subf %25, %17 : vector<8x16xf32>
    %27 = math.exp %26 : vector<8x16xf32>
    %28 = arith.mulf %24, %27 : vector<8x16xf32>
    %29 = tpu.iota {dimensions = array<i32: 0>} : vector<8x1xi32>
    %c8_i32 = arith.constant 8 : i32
    %30 = arith.muli %arg0, %c8_i32 : i32
    %31 = vector.broadcast %30 : i32 to vector<8x1xi32>
    %32 = arith.addi %29, %31 : vector<8x1xi32>
    %c20_i32 = arith.constant 20 : i32
    %33 = vector.broadcast %c20_i32 : i32 to vector<8x1xi32>
    %34 = arith.cmpi slt, %32, %33 : vector<8x1xi32>
    %cst_16 = arith.constant 0.000000e+00 : f32
    %35 = vector.shape_cast %34 : vector<8x1xi1> to vector<8x1xi1>
    %36 = vector.broadcast %35 : vector<8x1xi1> to vector<8x16xi1>
    %37 = vector.broadcast %cst_16 : f32 to vector<8x16xf32>
    %38 = arith.select %36, %28, %37 : vector<8x16xi1>, vector<8x16xf32>
    %39 = vector.shape_cast %38 : vector<8x16xf32> to vector<1x8x16xf32>
    %cst_17 = arith.constant dense<0.000000e+00> : vector<8x16xf32>
    %40 = vector.multi_reduction <add>, %39, %cst_17 [0] : vector<1x8x16xf32> to vector<8x16xf32>
    %c0_18 = arith.constant 0 : index
    %c0_19 = arith.constant 0 : index
    %41 = vector.load %arg8[%c0_18, %c0_19] : memref<8x16xf32, #tpu.memory_space<vmem>>, vector<8x16xf32>
    tpu.vector_store %arg8[%c0_18, %c0_19], %40 {strides = array<i32>} : memref<8x16xf32, #tpu.memory_space<vmem>>, vector<8x16xf32>,
    return
  }
  func.func @transform_0(%arg0: i32) -> (i32, i32) {
    %c0_i32 = arith.constant 0 : i32
    %c0_i32_0 = arith.constant 0 : i32
    return %arg0, %c0_i32 : i32, i32
  }
  func.func @transform_1(%arg0: i32) -> (i32, i32) {
    %c0_i32 = arith.constant 0 : i32
    %c0_i32_0 = arith.constant 0 : i32
    return %arg0, %c0_i32 : i32, i32
  }
  func.func @transform_2(%arg0: i32) -> (i32, i32) {
    %c0_i32 = arith.constant 0 : i32
    %c0_i32_0 = arith.constant 0 : i32
    return %arg0, %c0_i32 : i32, i32
  }
  func.func @transform_3(%arg0: i32) -> (i32, i32) {
    %c0_i32 = arith.constant 0 : i32
    %c0_i32_0 = arith.constant 0 : i32
    %c0_i32_1 = arith.constant 0 : i32
    return %c0_i32, %c0_i32_0 : i32, i32
  }
  func.func @transform_4(%arg0: i32) -> (i32, i32) {
    %c0_i32 = arith.constant 0 : i32
    %c0_i32_0 = arith.constant 0 : i32
    %c0_i32_1 = arith.constant 0 : i32
    return %c0_i32, %c0_i32_0 : i32, i32
  }
  func.func @transform_5(%arg0: i32) -> (i32, i32) {
    %c0_i32 = arith.constant 0 : i32
    %c0_i32_0 = arith.constant 0 : i32
    %c0_i32_1 = arith.constant 0 : i32
    return %c0_i32, %c0_i32_0 : i32, i32
  }
  func.func @transform_6(%arg0: i32) -> (i32, i32) {
    %c0_i32 = arith.constant 0 : i32
    %c0_i32_0 = arith.constant 0 : i32
    %c0_i32_1 = arith.constant 0 : i32
    return %c0_i32, %c0_i32_0 : i32, i32
  }
  func.func @transform_7(%arg0: i32) -> (i32, i32) {
    %c0_i32 = arith.constant 0 : i32
    %c0_i32_0 = arith.constant 0 : i32
    return %arg0, %c0_i32 : i32, i32
  }
}

</mosaic_0001>

<llo_original>
// kernel: tpu_custom_call.1
$region0: #{tpu_custom_call.1}
  #allocation0 [shape = 'u32[]', space=smem, size = 0x4, offset = 0x4, fixed_abs, tag = 'smem constant byte address 0x4 - core index']
  #allocation1 [shape = 'u32[144,128]{1,0:T(1,128)}', space=vmem, size = 0x12000, scoped, tag = 'internal scratch']
  %s0 = inlined_call_operand.vmem [shape: f32[20,16], index: 0, kind: input, shape index: {}]
  %s1 = inlined_call_operand.vmem [shape: f32[20,16], index: 1, kind: input, shape index: {}]
  %s2 = inlined_call_operand.vmem [shape: f32[20,16], index: 2, kind: input, shape index: {}]
  %s3 = inlined_call_operand.vmem [shape: bf16[16,32], index: 3, kind: input, shape index: {}]
  %s4 = inlined_call_operand.vmem [shape: f32[1,32], index: 4, kind: input, shape index: {}]
  %s5 = inlined_call_operand.vmem [shape: bf16[32,32], index: 5, kind: input, shape index: {}]
  %s6 = inlined_call_operand.vmem [shape: f32[1,32], index: 6, kind: input, shape index: {}]
  %s7 = inlined_call_operand.vmem [shape: f32[24,16], index: 7, kind: output, shape index: {}]
  %s8 = sld [smem:[#allocation0]]
  $region61: #{tpu_custom_call.1} parent=0
    _
  %s10 = ssub.s32 1, %s8
  %s11 = scalar_select 0, %s10, %s8
  loop: start=0, step=1, limit=5
  $region2: #{tpu_custom_call.1} parent=0 // loop_pre_header
    _
  $region3: #{tpu_custom_call.1} parent=0 // loop_header
    %s13 = sphi 0, %s17
    %p14 = scmp.ge.s32.totalorder %s13, 5
    %s23 = sphi 0, %s25
    %s26 = sphi 0, %s23
    %s27 = sphi 0, %s26
    %s43 = sphi 0, %s27
    %s49 = sphi 0, %s51
    %s52 = sphi 0, %s49
    %s53 = sphi 0, %s52
    %s69 = sphi 0, %s53
    %s75 = sphi 0, %s77
    %s78 = sphi 0, %s75
    %s79 = sphi 0, %s78
    %s95 = sphi 0, %s79
    %s99 = sphi 0, %s99
    %s101 = sphi 0, %s99
    %s102 = sphi 0, %s101
    %s116 = sphi 0, %s102
    %s120 = sphi 0, %s120
    %s122 = sphi 0, %s120
    %s123 = sphi 0, %s122
    %s137 = sphi 0, %s123
    %s141 = sphi 0, %s141
    %s143 = sphi 0, %s141
    %s144 = sphi 0, %s143
    %s158 = sphi 0, %s144
    %s162 = sphi 0, %s162
    %s164 = sphi 0, %s162
    %s165 = sphi 0, %s164
    %s179 = sphi 0, %s165
    %s185 = sphi 0, %s187
    %s188 = sphi 0, %s185
    %s189 = sphi 0, %s188
    %s205 = sphi 0, %s189
  $region4: #{tpu_custom_call.1} parent=0 // loop_header_branch
    %16 = sbr.rel (%p14) target = $region8
  $region5: #{tpu_custom_call.1} parent=0 // loop_body
    %s18 = ssub.s32 %s13, 1
    %s19 = ssub.s32 %s13, 2
    %s20 = sadd.s32 %s13, 1
    %s21 = ssub.s32 %s13, %s20
    %p22 = scmp.eq.s32.totalorder %s21, 0
    %s24 = sadd.s32 %s23, 1
    %s25 = scalar_select %p22, %s23, %s24
    %p28 = pneg %p22
    %p29 = scmp.eq.s32.totalorder %s13, 2
    %p30 = por %p28, %p29
    %p31 = scmp.ne.s32.totalorder %s23, %s26
    %p32 = scmp.eq.s32.totalorder %s13, 0
    %p33 = por %p31, %p32
    %p34 = scmp.ne.s32.totalorder %s23, %s26
    %p35 = scmp.eq.s32.totalorder %s18, 2
    %p36 = por %p34, %p35
    %p37 = scmp.ne.s32.totalorder %s26, %s27
    %p38 = scmp.eq.s32.totalorder %s18, 0
    %p39 = por %p37, %p38
    %p40 = scmp.ne.s32.totalorder %s26, %s27
    %p41 = scmp.eq.s32.totalorder %s19, 2
    %p42 = por %p40, %p41
    %p44 = scmp.ne.s32.totalorder %s27, %s43
    %p45 = scmp.eq.s32.totalorder %s19, 0
    %p46 = por %p44, %p45
    %s47 = ssub.s32 %s13, %s20
    %p48 = scmp.eq.s32.totalorder %s47, 0
    %s50 = sadd.s32 %s49, 1
    %s51 = scalar_select %p48, %s49, %s50
    %p54 = pneg %p48
    %p55 = scmp.eq.s32.totalorder %s13, 2
    %p56 = por %p54, %p55
    %p57 = scmp.ne.s32.totalorder %s49, %s52
    %p58 = scmp.eq.s32.totalorder %s13, 0
    %p59 = por %p57, %p58
    %p60 = scmp.ne.s32.totalorder %s49, %s52
    %p61 = scmp.eq.s32.totalorder %s18, 2
    %p62 = por %p60, %p61
    %p63 = scmp.ne.s32.totalorder %s52, %s53
    %p64 = scmp.eq.s32.totalorder %s18, 0
    %p65 = por %p63, %p64
    %p66 = scmp.ne.s32.totalorder %s52, %s53
    %p67 = scmp.eq.s32.totalorder %s19, 2
    %p68 = por %p66, %p67
    %p70 = scmp.ne.s32.totalorder %s53, %s69
    %p71 = scmp.eq.s32.totalorder %s19, 0
    %p72 = por %p70, %p71
    %s73 = ssub.s32 %s13, %s20
    %p74 = scmp.eq.s32.totalorder %s73, 0
    %s76 = sadd.s32 %s75, 1
    %s77 = scalar_select %p74, %s75, %s76
    %p80 = pneg %p74
    %p81 = scmp.eq.s32.totalorder %s13, 2
    %p82 = por %p80, %p81
    %p83 = scmp.ne.s32.totalorder %s75, %s78
    %p84 = scmp.eq.s32.totalorder %s13, 0
    %p85 = por %p83, %p84
    %p86 = scmp.ne.s32.totalorder %s75, %s78
    %p87 = scmp.eq.s32.totalorder %s18, 2
    %p88 = por %p86, %p87
    %p89 = scmp.ne.s32.totalorder %s78, %s79
    %p90 = scmp.eq.s32.totalorder %s18, 0
    %p91 = por %p89, %p90
    %p92 = scmp.ne.s32.totalorder %s78, %s79
    %p93 = scmp.eq.s32.totalorder %s19, 2
    %p94 = por %p92, %p93
    %p96 = scmp.ne.s32.totalorder %s79, %s95
    %p97 = scmp.eq.s32.totalorder %s19, 0
    %p98 = por %p96, %p97
    %s100 = sadd.s32 %s99, 1
    %p103 = scmp.eq.s32.totalorder %s13, 2
    %p104 = scmp.ne.s32.totalorder %s99, %s101
    %p105 = scmp.eq.s32.totalorder %s13, 0
    %p106 = por %p104, %p105
    %p107 = scmp.ne.s32.totalorder %s99, %s101
    %p108 = scmp.eq.s32.totalorder %s18, 2
    %p109 = por %p107, %p108
    %p110 = scmp.ne.s32.totalorder %s101, %s102
    %p111 = scmp.eq.s32.totalorder %s18, 0
    %p112 = por %p110, %p111
    %p113 = scmp.ne.s32.totalorder %s101, %s102
    %p114 = scmp.eq.s32.totalorder %s19, 2
    %p115 = por %p113, %p114
    %p117 = scmp.ne.s32.totalorder %s102, %s116
    %p118 = scmp.eq.s32.totalorder %s19, 0
    %p119 = por %p117, %p118
    %s121 = sadd.s32 %s120, 1
    %p124 = scmp.eq.s32.totalorder %s13, 2
    %p125 = scmp.ne.s32.totalorder %s120, %s122
    %p126 = scmp.eq.s32.totalorder %s13, 0
    %p127 = por %p125, %p126
    %p128 = scmp.ne.s32.totalorder %s120, %s122
    %p129 = scmp.eq.s32.totalorder %s18, 2
    %p130 = por %p128, %p129
    %p131 = scmp.ne.s32.totalorder %s122, %s123
    %p132 = scmp.eq.s32.totalorder %s18, 0
    %p133 = por %p131, %p132
    %p134 = scmp.ne.s32.totalorder %s122, %s123
    %p135 = scmp.eq.s32.totalorder %s19, 2
    %p136 = por %p134, %p135
    %p138 = scmp.ne.s32.totalorder %s123, %s137
    %p139 = scmp.eq.s32.totalorder %s19, 0
    %p140 = por %p138, %p139
    %s142 = sadd.s32 %s141, 1
    %p145 = scmp.eq.s32.totalorder %s13, 2
    %p146 = scmp.ne.s32.totalorder %s141, %s143
    %p147 = scmp.eq.s32.totalorder %s13, 0
    %p148 = por %p146, %p147
    %p149 = scmp.ne.s32.totalorder %s141, %s143
    %p150 = scmp.eq.s32.totalorder %s18, 2
    %p151 = por %p149, %p150
    %p152 = scmp.ne.s32.totalorder %s143, %s144
    %p153 = scmp.eq.s32.totalorder %s18, 0
    %p154 = por %p152, %p153
    %p155 = scmp.ne.s32.totalorder %s143, %s144
    %p156 = scmp.eq.s32.totalorder %s19, 2
    %p157 = por %p155, %p156
    %p159 = scmp.ne.s32.totalorder %s144, %s158
    %p160 = scmp.eq.s32.totalorder %s19, 0
    %p161 = por %p159, %p160
    %s163 = sadd.s32 %s162, 1
    %p166 = scmp.eq.s32.totalorder %s13, 2
    %p167 = scmp.ne.s32.totalorder %s162, %s164
    %p168 = scmp.eq.s32.totalorder %s13, 0
    %p169 = por %p167, %p168
    %p170 = scmp.ne.s32.totalorder %s162, %s164
    %p171 = scmp.eq.s32.totalorder %s18, 2
    %p172 = por %p170, %p171
    %p173 = scmp.ne.s32.totalorder %s164, %s165
    %p174 = scmp.eq.s32.totalorder %s18, 0
    %p175 = por %p173, %p174
    %p176 = scmp.ne.s32.totalorder %s164, %s165
    %p177 = scmp.eq.s32.totalorder %s19, 2
    %p178 = por %p176, %p177
    %p180 = scmp.ne.s32.totalorder %s165, %s179
    %p181 = scmp.eq.s32.totalorder %s19, 0
    %p182 = por %p180, %p181
    %s183 = ssub.s32 %s13, %s20
    %p184 = scmp.eq.s32.totalorder %s183, 0
    %s186 = sadd.s32 %s185, 1
    %s187 = scalar_select %p184, %s185, %s186
    %p190 = pneg %p184
    %p191 = scmp.eq.s32.totalorder %s13, 2
    %p192 = por %p190, %p191
    %p193 = scmp.ne.s32.totalorder %s185, %s188
    %p194 = scmp.eq.s32.totalorder %s13, 0
    %p195 = por %p193, %p194
    %p196 = scmp.ne.s32.totalorder %s185, %s188
    %p197 = scmp.eq.s32.totalorder %s18, 2
    %p198 = por %p196, %p197
    %p199 = scmp.ne.s32.totalorder %s188, %s189
    %p200 = scmp.eq.s32.totalorder %s18, 0
    %p201 = por %p199, %p200
    %p202 = scmp.ne.s32.totalorder %s188, %s189
    %p203 = scmp.eq.s32.totalorder %s19, 2
    %p204 = por %p202, %p203
    %p206 = scmp.ne.s32.totalorder %s189, %s205
    %p207 = scmp.eq.s32.totalorder %s19, 0
    %p208 = por %p206, %p207
    %p209 = scmp.le.s32.totalorder 1, %s13
    %p210 = scmp.lt.s32.totalorder %s13, 4
    %p211 = pnand %p209, %p210
    %p212 = pneg %p211
    // Predicated region
    $region9: #{tpu_custom_call.1} parent=5 // pred_check
      _
    $region10: #{tpu_custom_call.1} parent=5 // pred_check_branch
      %214 = sbr.rel (%p211) target = $region12
    $region11: #{tpu_custom_call.1} parent=5 // pred_region
      %s215 = ssub.s32 %s13, 1
      // Predicated region
      $region13: #{tpu_custom_call.1} parent=11 // pred_check
        %p216 = pneg %p112
      $region14: #{tpu_custom_call.1} parent=11 // pred_check_branch
        %218 = sbr.rel (%p216) target = $region16
      $region15: #{tpu_custom_call.1} parent=11 // pred_region
        _
      $region16: #{tpu_custom_call.1} parent=11 // pred_fallthru
        _
      // Predicated region
      $region17: #{tpu_custom_call.1} parent=11 // pred_check
        %p219 = pneg %p133
      $region18: #{tpu_custom_call.1} parent=11 // pred_check_branch
        %221 = sbr.rel (%p219) target = $region20
      $region19: #{tpu_custom_call.1} parent=11 // pred_region
        _
      $region20: #{tpu_custom_call.1} parent=11 // pred_fallthru
        _
      // Predicated region
      $region21: #{tpu_custom_call.1} parent=11 // pred_check
        %p222 = pneg %p154
      $region22: #{tpu_custom_call.1} parent=11 // pred_check_branch
        %224 = sbr.rel (%p222) target = $region24
      $region23: #{tpu_custom_call.1} parent=11 // pred_region
        _
      $region24: #{tpu_custom_call.1} parent=11 // pred_fallthru
        _
      // Predicated region
      $region25: #{tpu_custom_call.1} parent=11 // pred_check
        %p225 = pneg %p175
      $region26: #{tpu_custom_call.1} parent=11 // pred_check_branch
        %227 = sbr.rel (%p225) target = $region28
      $region27: #{tpu_custom_call.1} parent=11 // pred_region
        _
      $region28: #{tpu_custom_call.1} parent=11 // pred_fallthru
        _
    $region12: #{tpu_custom_call.1} parent=5 // pred_fallthru
      _
    %p228 = scmp.lt.s32.totalorder %s13, 3
    // Predicated region
    $region29: #{tpu_custom_call.1} parent=5 // pred_check
      %p229 = pneg %p228
    $region30: #{tpu_custom_call.1} parent=5 // pred_check_branch
      %231 = sbr.rel (%p229) target = $region32
    $region31: #{tpu_custom_call.1} parent=5 // pred_region
      // Predicated region
      $region33: #{tpu_custom_call.1} parent=31 // pred_check
        %p232 = pneg %p33
      $region34: #{tpu_custom_call.1} parent=31 // pred_check_branch
        %234 = sbr.rel (%p232) target = $region36
      $region35: #{tpu_custom_call.1} parent=31 // pred_region
        %p235 = scmp.lt.s32.totalorder %s13, 2
        %s236 = scalar_select %p235, %s13, 2
        %s237 = smul.addr %s236, 8
        %s238 = scalar_lea.vmem %s0, %s237
      $region36: #{tpu_custom_call.1} parent=31 // pred_fallthru
        _
      // Predicated region
      $region37: #{tpu_custom_call.1} parent=31 // pred_check
        %p239 = pneg %p59
      $region38: #{tpu_custom_call.1} parent=31 // pred_check_branch
        %241 = sbr.rel (%p239) target = $region40
      $region39: #{tpu_custom_call.1} parent=31 // pred_region
        %p242 = scmp.lt.s32.totalorder %s13, 2
        %s243 = scalar_select %p242, %s13, 2
        %s244 = smul.addr %s243, 8
        %s245 = scalar_lea.vmem %s1, %s244
      $region40: #{tpu_custom_call.1} parent=31 // pred_fallthru
        _
      // Predicated region
      $region41: #{tpu_custom_call.1} parent=31 // pred_check
        %p246 = pneg %p85
      $region42: #{tpu_custom_call.1} parent=31 // pred_check_branch
        %248 = sbr.rel (%p246) target = $region44
      $region43: #{tpu_custom_call.1} parent=31 // pred_region
        %p249 = scmp.lt.s32.totalorder %s13, 2
        %s250 = scalar_select %p249, %s13, 2
        %s251 = smul.addr %s250, 8
        %s252 = scalar_lea.vmem %s2, %s251
      $region44: #{tpu_custom_call.1} parent=31 // pred_fallthru
        _
    $region32: #{tpu_custom_call.1} parent=5 // pred_fallthru
      _
    %p253 = scmp.le.s32.totalorder 1, %s13
    %p254 = scmp.lt.s32.totalorder %s13, 4
    %p255 = pnand %p253, %p254
    %p256 = pneg %p255
    // Predicated region
    $region45: #{tpu_custom_call.1} parent=5 // pred_check
      _
    $region46: #{tpu_custom_call.1} parent=5 // pred_check_branch
      %258 = sbr.rel (%p255) target = $region48
    $region47: #{tpu_custom_call.1} parent=5 // pred_region
      %s259 = ssub.s32 %s13, 1
      %p260 = scmp.lt.s32.totalorder %s18, 2
      %s261 = scalar_select %p260, %s18, 2
      %s262 = smul.addr %s261, 8
      %s263 = scalar_lea.vmem %s0, %s262
      %p264 = pneg %p39
      %p265 = pneg %p36
      %p266 = scmp.lt.s32.totalorder %s18, 2
      %s267 = scalar_select %p266, %s18, 2
      %s268 = smul.addr %s267, 8
      %s269 = scalar_lea.vmem %s1, %s268
      %p270 = pneg %p65
      %p271 = pneg %p62
      %p272 = scmp.lt.s32.totalorder %s18, 2
      %s273 = scalar_select %p272, %s18, 2
      %s274 = smul.addr %s273, 8
      %s275 = scalar_lea.vmem %s2, %s274
      %p276 = pneg %p91
      %p277 = pneg %p88
      %p278 = pneg %p112
      %p279 = pneg %p109
      %p280 = pneg %p133
      %p281 = pneg %p130
      %p282 = pneg %p154
      %p283 = pneg %p151
      %p284 = pneg %p175
      %p285 = pneg %p172
      %p286 = pneg %p201
      %p287 = pneg %p198
      %p288 = scmp.lt.s32.totalorder %s18, 2
      %s289 = scalar_select %p288, %s18, 2
      %s290 = smul.addr %s289, 8
      %s291 = scalar_lea.vmem %s7, %s290
      %p292 = scmp.lt.s32.totalorder %s18, 2
      %s293 = scalar_select %p292, %s18, 2
      %s294 = smul.addr %s293, 8
      %s295 = scalar_lea.vmem %s0, %s294
      %p296 = scmp.lt.s32.totalorder %s18, 2
      %s297 = scalar_select %p296, %s18, 2
      %s298 = smul.addr %s297, 8
      %s299 = scalar_lea.vmem %s1, %s298
      %p300 = scmp.lt.s32.totalorder %s18, 2
      %s301 = scalar_select %p300, %s18, 2
      %s302 = smul.addr %s301, 8
      %s303 = scalar_lea.vmem %s2, %s302
      %p304 = scmp.lt.s32.totalorder %s18, 2
      %s305 = scalar_select %p304, %s18, 2
      %s306 = smul.addr %s305, 8
      %s307 = scalar_lea.vmem %s7, %s306
      %v309 = vld [vmem:[%s295] sm:$0xff]
      %v310 = vpack.c.bf16 %v309, %v309
      %v311 = vld [vmem:[%s3] sm:$0xf]
      %v312 = vld [vmem:[%s3 + $0x4] sm:$0xf]
      %v313 = vld [vmem:[%s4] sm:$0x1]
      %v315 = vlaneseq
      %v316 = vshrl.u32 %v315, 7
      %v317 = vsub.s32 0, %v316
      %v318 = vrot.slane %v313, %v317
      %v322 = vunpack.c.l.b16 %v311
      %v323 = vunpack.c.l.b16 %v312
      %v324 = vpack.c.b16 %v323, %v322
      %vm326 = vcmask 130048
      %v328 = vsel %vm326, %v310, 0
      %330 = vmatprep.subr.bf16.mxu0 0
      %331 = vmatpush1.bf16.msra.mxu0 %v324
      %332 = vmatprep.subr.bf16.mxu0 0
      %333 = vmatpush1.bf16.msra.mxu0 0
      %334 = vmatprep.subr.bf16.mxu0 0
      %335 = vmatpush1.bf16.msra.mxu0 0
      %336 = vmatprep.subr.bf16.mxu0 0
      %337 = vmatpush1.bf16.msra.mxu0 0
      %338 = vmatprep.subr.bf16.mxu0 0
      %339 = vmatpush1.bf16.msra.mxu0 0
      %340 = vmatprep.subr.bf16.mxu0 0
      %341 = vmatpush1.bf16.msra.mxu0 0
      %342 = vmatprep.subr.bf16.mxu0 0
      %343 = vmatpush1.bf16.msra.mxu0 0
      %344 = vmatprep.subr.bf16.mxu0 0
      %345 = vmatpush1.bf16.msra.mxu0 0
      %346 = vmatprep.subr.bf16.mxu0 0
      %347 = vmatpush1.bf16.msra.mxu0 0
      %348 = vmatprep.subr.bf16.mxu0 0
      %349 = vmatpush1.bf16.msra.mxu0 0
      %350 = vmatprep.subr.bf16.mxu0 0
      %351 = vmatpush1.bf16.msra.mxu0 0
      %352 = vmatprep.subr.bf16.mxu0 0
      %353 = vmatpush1.bf16.msra.mxu0 0
      %354 = vmatprep.subr.bf16.mxu0 0
      %355 = vmatpush1.bf16.msra.mxu0 0
      %356 = vmatprep.subr.bf16.mxu0 0
      %357 = vmatpush1.bf16.msra.mxu0 0
      %358 = vmatprep.subr.bf16.mxu0 0
      %359 = vmatpush1.bf16.msra.mxu0 0
      %360 = vmatprep.subr.bf16.mxu0 0
      %361 = vmatpush1.bf16.msra.mxu0 0
      %362 = vmatprep.mubr.bf16.mxu0 0
      %363 = vmatmul.mubr.bf16.gmra.mrb[0].mxu0 %v328
      %v364 = vpop.f32.mrb[0].mxu0
      %v365 = vadd.f32 %v318, %v364
      %v366 = vpop.f32.mrb[0].mxu0
      %v367 = vpop.f32.mrb[0].mxu0
      %v368 = vpop.f32.mrb[0].mxu0
      %369 = vdwg.mxu0
      %v370 = vmax.f32 %v365, 0.0
      %v371 = vpack.c.bf16 %v370, %v370
      %v372 = vld [vmem:[%s5] sm:$0xf]
      %v373 = vld [vmem:[%s5 + $0x4] sm:$0xf]
      %v374 = vld [vmem:[%s5 + $0x8] sm:$0xf]
      %v375 = vld [vmem:[%s5 + $0xc] sm:$0xf]
      %v376 = vld [vmem:[%s6] sm:$0x1]
      %v378 = vlaneseq
      %v379 = vshrl.u32 %v378, 7
      %v380 = vsub.s32 0, %v379
      %v381 = vrot.slane %v376, %v380
      %v387 = vunpack.c.l.b16 %v372
      %v388 = vunpack.c.l.b16 %v373
      %v389 = vunpack.c.l.b16 %v374
      %v390 = vunpack.c.l.b16 %v375
      %v391 = vpack.c.b16 %v388, %v387
      %v392 = vpack.c.b16 %v390, %v389
      %vm395 = vcmask 261120
      %v397 = vsel %vm395, %v371, 0
      %399 = vmatprep.subr.bf16.mxu0 0
      %400 = vmatpush1.bf16.msra.mxu0 %v391
      %401 = vmatprep.subr.bf16.mxu0 0
      %402 = vmatpush1.bf16.msra.mxu0 %v392
      %403 = vmatprep.subr.bf16.mxu0 0
      %404 = vmatpush1.bf16.msra.mxu0 0
      %405 = vmatprep.subr.bf16.mxu0 0
      %406 = vmatpush1.bf16.msra.mxu0 0
      %407 = vmatprep.subr.bf16.mxu0 0
      %408 = vmatpush1.bf16.msra.mxu0 0
      %409 = vmatprep.subr.bf16.mxu0 0
      %410 = vmatpush1.bf16.msra.mxu0 0
      %411 = vmatprep.subr.bf16.mxu0 0
      %412 = vmatpush1.bf16.msra.mxu0 0
      %413 = vmatprep.subr.bf16.mxu0 0
      %414 = vmatpush1.bf16.msra.mxu0 0
      %415 = vmatprep.subr.bf16.mxu0 0
      %416 = vmatpush1.bf16.msra.mxu0 0
      %417 = vmatprep.subr.bf16.mxu0 0
      %418 = vmatpush1.bf16.msra.mxu0 0
      %419 = vmatprep.subr.bf16.mxu0 0
      %420 = vmatpush1.bf16.msra.mxu0 0
      %421 = vmatprep.subr.bf16.mxu0 0
      %422 = vmatpush1.bf16.msra.mxu0 0
      %423 = vmatprep.subr.bf16.mxu0 0
      %424 = vmatpush1.bf16.msra.mxu0 0
      %425 = vmatprep.subr.bf16.mxu0 0
      %426 = vmatpush1.bf16.msra.mxu0 0
      %427 = vmatprep.subr.bf16.mxu0 0
      %428 = vmatpush1.bf16.msra.mxu0 0
      %429 = vmatprep.subr.bf16.mxu0 0
      %430 = vmatpush1.bf16.msra.mxu0 0
      %431 = vmatprep.mubr.bf16.mxu0 0
      %432 = vmatmul.mubr.bf16.gmra.mrb[0].mxu0 %v397
      %v433 = vpop.f32.mrb[0].mxu0
      %v434 = vadd.f32 %v381, %v433
      %v435 = vpop.f32.mrb[0].mxu0
      %v436 = vpop.f32.mrb[0].mxu0
      %v437 = vpop.f32.mrb[0].mxu0
      %438 = vdwg.mxu0
      %v439 = vtanh.pop %v434
      %v440 = vld [vmem:[%s303] sm:$0xff]
      %v441 = vsub.f32 %v434, %v440
      %v442 = vmul.f32 %v441, %v441
      %v443 = vld [vmem:[%s299] sm:$0xff]
      %v444 = vsub.f32 %v434, %v443
      %v445 = vmul.f32 %v444, %v444
      %v446 = vsub.f32 %v442, %v445
      %v447 = vsub.f32 0.0, %v439
      %v448 = vmul.f32 %v447, 1.442695
      %v449 = vpow.pop %v448
      %451 = vrot.lane.b32.xlu0 %v449, 112
      %v452 = vpop.permute.xlu0 %451
      %v454 = vmul.f32 %v446, %v452
      %v455 = vlaneseq
      %v456 = vshrl.u32 %v455, 7
      %s457 = smul.u32 %s18, 8
      %v458 = vstv %s457
      %v459 = vadd.s32 %v456, %v458
      %vm460 = vcmp.lt.s32.totalorder %v459, 20
      %v461 = vsel %vm460, 1, 0
      %vm462 = vcmp.eq.s32.totalorder %v461, 1
      %v463 = vsel %vm462, %v454, 0.0
      %v464 = vadd.f32 %v463, 0.0
      %465 = vst.msk [vmem:[%s307] sm:$0xff] %vm326, %v464
      %p466 = scmp.lt.s32.totalorder %s18, 2
      %s467 = scalar_select %p466, %s18, 2
      %s468 = smul.addr %s467, 8
      %s469 = scalar_lea.vmem %s7, %s468
      // Predicated region
      $region49: #{tpu_custom_call.1} parent=47 // pred_check
        %p470 = pneg %p198
      $region50: #{tpu_custom_call.1} parent=47 // pred_check_branch
        %472 = sbr.rel (%p470) target = $region52
      $region51: #{tpu_custom_call.1} parent=47 // pred_region
        _
      $region52: #{tpu_custom_call.1} parent=47 // pred_fallthru
        _
    $region48: #{tpu_custom_call.1} parent=5 // pred_fallthru
      _
    %p473 = scmp.le.s32.totalorder 2, %s13
    // Predicated region
    $region53: #{tpu_custom_call.1} parent=5 // pred_check
      %p474 = pneg %p473
    $region54: #{tpu_custom_call.1} parent=5 // pred_check_branch
      %476 = sbr.rel (%p474) target = $region56
    $region55: #{tpu_custom_call.1} parent=5 // pred_region
      %s477 = ssub.s32 %s13, 2
      // Predicated region
      $region57: #{tpu_custom_call.1} parent=55 // pred_check
        %p478 = pneg %p204
      $region58: #{tpu_custom_call.1} parent=55 // pred_check_branch
        %480 = sbr.rel (%p478) target = $region60
      $region59: #{tpu_custom_call.1} parent=55 // pred_region
        %p481 = scmp.lt.s32.totalorder %s19, 2
        %s482 = scalar_select %p481, %s19, 2
        %s483 = smul.addr %s482, 8
        %s484 = scalar_lea.vmem %s7, %s483
      $region60: #{tpu_custom_call.1} parent=55 // pred_fallthru
        _
    $region56: #{tpu_custom_call.1} parent=5 // pred_fallthru
      _
  $region6: #{tpu_custom_call.1} parent=0 // loop_footer
    %s17 = sadd.s32 1, %s13
  $region7: #{tpu_custom_call.1} parent=0 // loop_footer_branch
    %12 = sbr.rel target = $region3
  $region8: #{tpu_custom_call.1} parent=0 // loop_exit
    _

</llo_original>
